<compile_context>
chip_gen: v7x
topology: tpu7x:2x2x1
jax: 0.10.0
libtpu: 0.0.40
codegen_flags: <defaults>
</compile_context>

<pallas_src>
import jax
import jax.numpy as jnp
from jax.experimental import pallas as pl
from jax.experimental.pallas import tpu as pltpu

HID = 64  # lin1/lin2 hidden width


def _rup8(n):
    return ((n + 7) // 8) * 8


# ----------------------------- Pallas kernel ---------------------------------
def make_vf_kernel(batch, act_dim, in_channels, off_w1, off_w2, off_tail):
    C = in_channels

    def vf_kernel(a_ref, x_ref, w_ref, o_ref):
        a = a_ref[0]                                          # (N, N)  this instance
        x = x_ref[0]                                          # (N, C)  this instance

        # Static slices of the packed parameter block (offsets are 8-row aligned,
        # so every slice is sublane-aligned; no relayout cost). The pack is
        # resident in VMEM across the whole grid (constant index_map).
        wg = w_ref[0:C, 0:C]                                  # (C, C)
        w1 = w_ref[off_w1:off_w1 + C, :]                      # (C, 64)
        b1 = w_ref[off_w1 + C:off_w1 + C + 1, :]              # (1, 64)
        w2 = w_ref[off_w2:off_w2 + HID, :]                    # (64, 64)
        b2 = w_ref[off_w2 + HID:off_w2 + HID + 1, :]          # (1, 64)
        w3 = w_ref[off_tail:off_tail + 1, :]                  # (1, 64)
        bg = w_ref[off_tail + 1:off_tail + 2, 0:C]            # (1, C)
        b3 = w_ref[off_tail + 2:off_tail + 3, 0:1]            # (1, 1)

        # GCNConv: A_hat @ (X @ Wg) + bg, then ReLU  (two MXU matmuls)
        xw = jnp.dot(x, wg, preferred_element_type=jnp.float32)        # (N, C)
        h = jnp.dot(a, xw, preferred_element_type=jnp.float32) + bg    # (N, C)
        h = jnp.maximum(h, 0.0)

        # residual + group-sum over consecutive act_dim rows (no G matrix / matmul)
        r = h + x                                             # (N, C)
        parts = [
            jnp.sum(r[b * act_dim:(b + 1) * act_dim, :], axis=0, keepdims=True)
            for b in range(batch)
        ]
        s = jnp.concatenate(parts, axis=0) if batch > 1 else parts[0]  # (B, C)

        # MLP head (bias adds are single VPU broadcast adds).
        z1 = jnp.maximum(jnp.dot(s, w1, preferred_element_type=jnp.float32) + b1, 0.0)
        z2 = jnp.maximum(jnp.dot(z1, w2, preferred_element_type=jnp.float32) + b2, 0.0)
        # final 64 -> 1 layer on the VPU (multiply + lane reduce) — skips an N=1 MXU pass.
        v = jnp.sum(z2 * w3, axis=-1, keepdims=True) + b3              # (B, 1)
        # lane-dense output block (1, 1, B): batch along the lane axis.
        o_ref[...] = v.reshape(1, 1, batch)

    return vf_kernel


def vf_forward_batched(a_hat, x, wpack, *, batch, act_dim, in_channels, offsets):
    """K independent critic evaluations in one pallas_call.

    a_hat: (K, N, N) f32, x: (K, N, C) f32, wpack: (P, 64) f32.
    Returns (K, batch) f32.
    """
    K, N, _ = a_hat.shape
    C = in_channels
    P = wpack.shape[0]
    kernel = make_vf_kernel(batch, act_dim, in_channels, *offsets)

    flops_per = (2 * N * C * C + 2 * N * N * C
                 + 2 * batch * (C * HID + HID * HID + HID))
    cost = pl.CostEstimate(
        flops=K * flops_per,
        transcendentals=0,
        bytes_accessed=K * 4 * (N * N + N * C + batch) + 4 * P * HID,
    )

    out = pl.pallas_call(
        kernel,
        out_shape=jax.ShapeDtypeStruct((K, 1, batch), jnp.float32),
        grid=(K,),
        in_specs=[
            pl.BlockSpec((1, N, N), lambda k: (k, 0, 0)),   # per-instance adjacency
            pl.BlockSpec((1, N, C), lambda k: (k, 0, 0)),   # per-instance features
            pl.BlockSpec((P, HID), lambda k: (0, 0)),       # weights: resident, no re-DMA
        ],
        out_specs=pl.BlockSpec((1, 1, batch), lambda k: (k, 0, 0)),
        compiler_params=pltpu.CompilerParams(
            dimension_semantics=("parallel",),               # shard instances across TCs (v7x)
        ),
        cost_estimate=cost,
    )(a_hat, x, wpack)
    return out[:, 0, :]                                      # (K, batch)


def vf_forward(a_hat, x, wpack, *, batch, act_dim, in_channels, offsets):
    """Single-instance convenience wrapper (matches the PyTorch module's forward)."""
    out = vf_forward_batched(a_hat[None], x[None], wpack, batch=batch,
                             act_dim=act_dim, in_channels=in_channels,
                             offsets=offsets)
    return out[0]                                            # (batch,)  == .squeeze(-1)


# ------------------------------ JAX glue --------------------------------------
def gcn_norm_adj(edge_index, num_nodes):
    """Dense GCN-normalized adjacency with self loops: A_hat[i,j] = d_i^-1/2 d_j^-1/2."""
    src = jnp.concatenate([edge_index[0], jnp.arange(num_nodes)])
    dst = jnp.concatenate([edge_index[1], jnp.arange(num_nodes)])
    deg = jnp.zeros((num_nodes,), jnp.float32).at[dst].add(1.0)
    dinv = jnp.where(deg > 0, 1.0 / jnp.sqrt(deg), 0.0)
    w = dinv[src] * dinv[dst]
    a = jnp.zeros((num_nodes, num_nodes), jnp.float32).at[dst, src].add(w)
    return a


def init_params(key, in_channels):
    ks = jax.random.split(key, 8)

    def u(k, shape, fan_in):
        lim = 1.0 / jnp.sqrt(fan_in)
        return jax.random.uniform(k, shape, jnp.float32, -lim, lim)

    return {
        "wg": u(ks[0], (in_channels, in_channels), in_channels),
        "bg": u(ks[1], (1, in_channels), in_channels),
        "w1": u(ks[2], (in_channels, HID), in_channels),
        "b1": u(ks[3], (1, HID), in_channels),
        "w2": u(ks[4], (HID, HID), HID),
        "b2": u(ks[5], (1, HID), HID),
        "w3": u(ks[6], (HID, 1), HID),
        "b3": u(ks[7], (1, 1), HID),
    }


def pack_params(params, in_channels):
    """Pack all weights/biases into one (P, 64) f32 array at 8-aligned row offsets."""
    assert in_channels <= HID, "packing layout requires in_channels <= 64"
    C = in_channels
    off_w1 = _rup8(C)                      # wg block occupies rows [0, C)
    off_w2 = off_w1 + _rup8(C + 1)         # w1 (C rows) + b1 (1 row)
    off_tail = off_w2 + _rup8(HID + 1)     # w2 (64 rows) + b2 (1 row)
    total = off_tail + 8                   # w3 / bg / b3 rows (padded to 8)

    w = jnp.zeros((total, HID), jnp.float32)
    w = w.at[0:C, 0:C].set(params["wg"])
    w = w.at[off_w1:off_w1 + C, :].set(params["w1"])
    w = w.at[off_w1 + C, :].set(params["b1"].reshape(-1))
    w = w.at[off_w2:off_w2 + HID, :].set(params["w2"])
    w = w.at[off_w2 + HID, :].set(params["b2"].reshape(-1))
    w = w.at[off_tail, :].set(params["w3"].reshape(-1))
    w = w.at[off_tail + 1, 0:C].set(params["bg"].reshape(-1))
    w = w.at[off_tail + 2, 0].set(params["b3"].reshape(-1)[0])
    return w, (off_w1, off_w2, off_tail)


def vf_reference(a_hat, x, batch, act_dim, params):
    """Pure-JAX reference mirroring the PyTorch forward."""
    h = jax.nn.relu(a_hat @ (x @ params["wg"]) + params["bg"])
    r = h + x
    s = r.reshape(batch, act_dim, -1).sum(axis=1)
    z1 = jax.nn.relu(s @ params["w1"] + params["b1"])
    z2 = jax.nn.relu(z1 @ params["w2"] + params["b2"])
    return (z2 @ params["w3"] + params["b3"])[:, 0]


if __name__ == "__main__":
    in_channels = 8
    act_dim = 16                                     # multiple of 8 (aligned group-sum)
    batch = 2
    num_nodes = batch * act_dim                      # 32 nodes per instance
    K = 4                                            # independent evaluations fused per call

    key = jax.random.PRNGKey(0)
    k_x, k_p = jax.random.split(key)

    params = init_params(k_p, in_channels)
    wpack, offsets = pack_params(params, in_channels)

    # K deterministic small graphs: ring + a few shifted cross edges.
    a_hats = []
    for i in range(K):
        src = jnp.concatenate([jnp.arange(num_nodes),
                               (jnp.array([0, 5, 10, 20]) + i) % num_nodes])
        dst = jnp.concatenate([(jnp.arange(num_nodes) + 1) % num_nodes,
                               (jnp.array([17, 23, 3, 31]) + i) % num_nodes])
        edge_index = jnp.stack([src, dst]).astype(jnp.int32)
        a_hats.append(gcn_norm_adj(edge_index, num_nodes))
    a_hat = jnp.stack(a_hats)                                          # (K, N, N)
    state = jax.random.normal(k_x, (K, num_nodes, in_channels), jnp.float32)

    out = vf_forward_batched(a_hat, state, wpack, batch=batch, act_dim=act_dim,
                             in_channels=in_channels, offsets=offsets)
    out = jax.block_until_ready(out)

    ref = jnp.stack([vf_reference(a_hat[i], state[i], batch, act_dim, params)
                     for i in range(K)])
    assert out.shape == (K, batch)
    assert jnp.allclose(out, ref, atol=1e-4, rtol=1e-4), (out, ref)

    # also exercise the single-instance wrapper (original module semantics)
    single = jax.block_until_ready(
        vf_forward(a_hat[0], state[0], wpack, batch=batch, act_dim=act_dim,
                   in_channels=in_channels, offsets=offsets))
    assert single.shape == (batch,)
    assert jnp.allclose(single, ref[0], atol=1e-4, rtol=1e-4), (single, ref[0])

    print("KERNEL_OK")
</pallas_src>

<mosaic_0001>
module attributes {stable_mosaic.version = 11 : i64} {
  func.func @vf_kernel(%arg0: i32, %arg1: memref<1x32x32xf32, #tpu.memory_space<vmem>>, %arg2: memref<1x32x8xf32, #tpu.memory_space<vmem>>, %arg3: memref<104x64xf32, #tpu.memory_space<vmem>>, %arg4: memref<1x1x2xf32, #tpu.memory_space<vmem>>) attributes {dimension_semantics = [#tpu.dimension_semantics<parallel>], iteration_bounds = array<i64: 4>, scalar_prefetch = 0 : i64, scratch_operands = 0 : i64, tpu.core_type = #tpu.core_type<tc>, window_params = [{transform_indices = @transform_0, window_bounds = array<i64: 1, 32, 32>}, {transform_indices = @transform_1, window_bounds = array<i64: 1, 32, 8>}, {pipeline_mode = #tpu.pipeline_mode<synchronous>, transform_indices = @transform_2, window_bounds = array<i64: 104, 64>}, {transform_indices = @transform_3, window_bounds = array<i64: 1, 1, 2>}]} {
    %c0 = arith.constant 0 : index
    %c0_0 = arith.constant 0 : index
    %c0_1 = arith.constant 0 : index
    %0 = vector.load %arg1[%c0, %c0_0, %c0_1] : memref<1x32x32xf32, #tpu.memory_space<vmem>>, vector<1x32x32xf32>
    %1 = vector.shape_cast %0 : vector<1x32x32xf32> to vector<32x32xf32>
    %c0_2 = arith.constant 0 : index
    %c0_3 = arith.constant 0 : index
    %c0_4 = arith.constant 0 : index
    %2 = vector.load %arg2[%c0_2, %c0_3, %c0_4] : memref<1x32x8xf32, #tpu.memory_space<vmem>>, vector<1x32x8xf32>
    %3 = vector.shape_cast %2 : vector<1x32x8xf32> to vector<32x8xf32>
    %c0_5 = arith.constant 0 : index
    %c0_6 = arith.constant 0 : index
    %4 = vector.load %arg3[%c0_5, %c0_6] : memref<104x64xf32, #tpu.memory_space<vmem>>, vector<8x8xf32>
    %c8 = arith.constant 8 : index
    %c0_7 = arith.constant 0 : index
    %5 = vector.load %arg3[%c8, %c0_7] : memref<104x64xf32, #tpu.memory_space<vmem>>, vector<8x64xf32>
    %c16 = arith.constant 16 : index
    %c0_8 = arith.constant 0 : index
    %6 = vector.load %arg3[%c16, %c0_8] : memref<104x64xf32, #tpu.memory_space<vmem>>, vector<1x64xf32>
    %c24 = arith.constant 24 : index
    %c0_9 = arith.constant 0 : index
    %7 = vector.load %arg3[%c24, %c0_9] : memref<104x64xf32, #tpu.memory_space<vmem>>, vector<64x64xf32>
    %c88 = arith.constant 88 : index
    %c0_10 = arith.constant 0 : index
    %8 = vector.load %arg3[%c88, %c0_10] : memref<104x64xf32, #tpu.memory_space<vmem>>, vector<1x64xf32>
    %c96 = arith.constant 96 : index
    %c0_11 = arith.constant 0 : index
    %9 = vector.load %arg3[%c96, %c0_11] : memref<104x64xf32, #tpu.memory_space<vmem>>, vector<1x64xf32>
    %c97 = arith.constant 97 : index
    %c0_12 = arith.constant 0 : index
    %10 = vector.load %arg3[%c97, %c0_12] : memref<104x64xf32, #tpu.memory_space<vmem>>, vector<1x8xf32>
    %c98 = arith.constant 98 : index
    %c0_13 = arith.constant 0 : index
    %11 = vector.load %arg3[%c98, %c0_13] : memref<104x64xf32, #tpu.memory_space<vmem>>, vector<1x1xf32>
    %cst = arith.constant dense<0.000000e+00> : vector<32x8xf32>
    %12 = tpu.matmul %3, %4, %cst {dimension_numbers = #tpu.dot_dimension_numbers<[1], [0], [0], [1], [0, 0, 1, 1], [], []>} : vector<32x8xf32>, vector<8x8xf32>, vector<32x8xf32> -> vector<32x8xf32>
    %cst_14 = arith.constant dense<0.000000e+00> : vector<32x8xf32>
    %13 = tpu.matmul %1, %12, %cst_14 {dimension_numbers = #tpu.dot_dimension_numbers<[1], [0], [0], [1], [0, 0, 1, 1], [], []>} : vector<32x32xf32>, vector<32x8xf32>, vector<32x8xf32> -> vector<32x8xf32>
    %14 = vector.broadcast %10 : vector<1x8xf32> to vector<32x8xf32>
    %15 = arith.addf %13, %14 : vector<32x8xf32>
    %cst_15 = arith.constant 0.000000e+00 : f32
    %16 = vector.broadcast %cst_15 : f32 to vector<32x8xf32>
    %17 = arith.maximumf %15, %16 : vector<32x8xf32>
    %18 = arith.addf %17, %3 : vector<32x8xf32>
    %19 = vector.extract_strided_slice %18 {offsets = [0, 0], sizes = [16, 8], strides = [1, 1]} : vector<32x8xf32> to vector<16x8xf32>
    %cst_16 = arith.constant dense<0.000000e+00> : vector<8xf32>
    %20 = vector.multi_reduction <add>, %19, %cst_16 [0] : vector<16x8xf32> to vector<8xf32>
    %21 = vector.shape_cast %20 : vector<8xf32> to vector<1x8xf32>
    %22 = vector.extract_strided_slice %18 {offsets = [16, 0], sizes = [16, 8], strides = [1, 1]} : vector<32x8xf32> to vector<16x8xf32>
    %cst_17 = arith.constant dense<0.000000e+00> : vector<8xf32>
    %23 = vector.multi_reduction <add>, %22, %cst_17 [0] : vector<16x8xf32> to vector<8xf32>
    %24 = vector.shape_cast %23 : vector<8xf32> to vector<1x8xf32>
    %25 = tpu.concatenate %21, %24 in 0 : vector<1x8xf32>, vector<1x8xf32> -> vector<2x8xf32>
    %cst_18 = arith.constant dense<0.000000e+00> : vector<2x64xf32>
    %26 = tpu.matmul %25, %5, %cst_18 {dimension_numbers = #tpu.dot_dimension_numbers<[1], [0], [0], [1], [0, 0, 1, 1], [], []>} : vector<2x8xf32>, vector<8x64xf32>, vector<2x64xf32> -> vector<2x64xf32>
    %27 = vector.broadcast %6 : vector<1x64xf32> to vector<2x64xf32>
    %28 = arith.addf %26, %27 : vector<2x64xf32>
    %cst_19 = arith.constant 0.000000e+00 : f32
    %29 = vector.broadcast %cst_19 : f32 to vector<2x64xf32>
    %30 = arith.maximumf %28, %29 : vector<2x64xf32>
    %cst_20 = arith.constant dense<0.000000e+00> : vector<2x64xf32>
    %31 = tpu.matmul %30, %7, %cst_20 {dimension_numbers = #tpu.dot_dimension_numbers<[1], [0], [0], [1], [0, 0, 1, 1], [], []>} : vector<2x64xf32>, vector<64x64xf32>, vector<2x64xf32> -> vector<2x64xf32>
    %32 = vector.broadcast %8 : vector<1x64xf32> to vector<2x64xf32>
    %33 = arith.addf %31, %32 : vector<2x64xf32>
    %cst_21 = arith.constant 0.000000e+00 : f32
    %34 = vector.broadcast %cst_21 : f32 to vector<2x64xf32>
    %35 = arith.maximumf %33, %34 : vector<2x64xf32>
    %36 = vector.broadcast %9 : vector<1x64xf32> to vector<2x64xf32>
    %37 = arith.mulf %35, %36 : vector<2x64xf32>
    %cst_22 = arith.constant dense<0.000000e+00> : vector<2xf32>
    %38 = vector.multi_reduction <add>, %37, %cst_22 [1] : vector<2x64xf32> to vector<2xf32>
    %39 = vector.shape_cast %38 : vector<2xf32> to vector<2x1xf32>
    %40 = vector.broadcast %11 : vector<1x1xf32> to vector<2x1xf32>
    %41 = arith.addf %39, %40 : vector<2x1xf32>
    %42 = vector.shape_cast %41 : vector<2x1xf32> to vector<1x1x2xf32>
    %c0_23 = arith.constant 0 : index
    %c0_24 = arith.constant 0 : index
    %c0_25 = arith.constant 0 : index
    %43 = vector.load %arg4[%c0_23, %c0_24, %c0_25] : memref<1x1x2xf32, #tpu.memory_space<vmem>>, vector<1x1x2xf32>
    tpu.vector_store %arg4[%c0_23, %c0_24, %c0_25], %42 {strides = array<i32>} : memref<1x1x2xf32, #tpu.memory_space<vmem>>, vector<1x1x2xf32>,
    return
  }
  func.func @transform_0(%arg0: i32) -> (i32, i32, i32) {
    %c0_i32 = arith.constant 0 : i32
    %c0_i32_0 = arith.constant 0 : i32
    %c0_i32_1 = arith.constant 0 : i32
    return %arg0, %c0_i32, %c0_i32_0 : i32, i32, i32
  }
  func.func @transform_1(%arg0: i32) -> (i32, i32, i32) {
    %c0_i32 = arith.constant 0 : i32
    %c0_i32_0 = arith.constant 0 : i32
    %c0_i32_1 = arith.constant 0 : i32
    return %arg0, %c0_i32, %c0_i32_0 : i32, i32, i32
  }
  func.func @transform_2(%arg0: i32) -> (i32, i32) {
    %c0_i32 = arith.constant 0 : i32
    %c0_i32_0 = arith.constant 0 : i32
    %c0_i32_1 = arith.constant 0 : i32
    return %c0_i32, %c0_i32_0 : i32, i32
  }
  func.func @transform_3(%arg0: i32) -> (i32, i32, i32) {
    %c0_i32 = arith.constant 0 : i32
    %c0_i32_0 = arith.constant 0 : i32
    %c0_i32_1 = arith.constant 0 : i32
    return %arg0, %c0_i32, %c0_i32_0 : i32, i32, i32
  }
}

</mosaic_0001>

<llo_original>
// kernel: tpu_custom_call.1
$region0: #{tpu_custom_call.1}
  #allocation0 [shape = 'u32[]', space=smem, size = 0x4, offset = 0x4, fixed_abs, tag = 'smem constant byte address 0x4 - core index']
  #allocation1 [shape = 'u32[144,128]{1,0:T(1,128)}', space=vmem, size = 0x12000, scoped, tag = 'internal scratch']
  %s0 = inlined_call_operand.vmem [shape: f32[4,32,32], index: 0, kind: input, shape index: {}]
  %s1 = inlined_call_operand.vmem [shape: f32[4,32,8], index: 1, kind: input, shape index: {}]
  %s2 = inlined_call_operand.vmem [shape: f32[104,64], index: 2, kind: input, shape index: {}]
  %s3 = inlined_call_operand.vmem [shape: f32[4,1,2], index: 3, kind: output, shape index: {}]
  %s4 = sld [smem:[#allocation0]]
  $region45: #{tpu_custom_call.1} parent=0
    _
  %s6 = ssub.s32 1, %s4
  %s7 = scalar_select 0, %s6, %s4
  loop: start=0, step=1, limit=6
  $region2: #{tpu_custom_call.1} parent=0 // loop_pre_header
    _
  $region3: #{tpu_custom_call.1} parent=0 // loop_header
    %s9 = sphi 0, %s13
    %p10 = scmp.ge.s32.totalorder %s9, 6
    %s19 = sphi 0, %s21
    %s22 = sphi 0, %s19
    %s23 = sphi 0, %s22
    %s39 = sphi 0, %s23
    %s45 = sphi 0, %s47
    %s48 = sphi 0, %s45
    %s49 = sphi 0, %s48
    %s65 = sphi 0, %s49
    %s69 = sphi 0, %s69
    %s71 = sphi 0, %s69
    %s72 = sphi 0, %s71
    %s86 = sphi 0, %s72
    %s92 = sphi 0, %s94
    %s95 = sphi 0, %s92
    %s96 = sphi 0, %s95
    %s112 = sphi 0, %s96
  $region4: #{tpu_custom_call.1} parent=0 // loop_header_branch
    %12 = sbr.rel (%p10) target = $region8
  $region5: #{tpu_custom_call.1} parent=0 // loop_body
    %s14 = ssub.s32 %s9, 1
    %s15 = ssub.s32 %s9, 2
    %s16 = sadd.s32 %s9, 1
    %s17 = ssub.s32 %s9, %s16
    %p18 = scmp.eq.s32.totalorder %s17, 0
    %s20 = sadd.s32 %s19, 1
    %s21 = scalar_select %p18, %s19, %s20
    %p24 = pneg %p18
    %p25 = scmp.eq.s32.totalorder %s9, 3
    %p26 = por %p24, %p25
    %p27 = scmp.ne.s32.totalorder %s19, %s22
    %p28 = scmp.eq.s32.totalorder %s9, 0
    %p29 = por %p27, %p28
    %p30 = scmp.ne.s32.totalorder %s19, %s22
    %p31 = scmp.eq.s32.totalorder %s14, 3
    %p32 = por %p30, %p31
    %p33 = scmp.ne.s32.totalorder %s22, %s23
    %p34 = scmp.eq.s32.totalorder %s14, 0
    %p35 = por %p33, %p34
    %p36 = scmp.ne.s32.totalorder %s22, %s23
    %p37 = scmp.eq.s32.totalorder %s15, 3
    %p38 = por %p36, %p37
    %p40 = scmp.ne.s32.totalorder %s23, %s39
    %p41 = scmp.eq.s32.totalorder %s15, 0
    %p42 = por %p40, %p41
    %s43 = ssub.s32 %s9, %s16
    %p44 = scmp.eq.s32.totalorder %s43, 0
    %s46 = sadd.s32 %s45, 1
    %s47 = scalar_select %p44, %s45, %s46
    %p50 = pneg %p44
    %p51 = scmp.eq.s32.totalorder %s9, 3
    %p52 = por %p50, %p51
    %p53 = scmp.ne.s32.totalorder %s45, %s48
    %p54 = scmp.eq.s32.totalorder %s9, 0
    %p55 = por %p53, %p54
    %p56 = scmp.ne.s32.totalorder %s45, %s48
    %p57 = scmp.eq.s32.totalorder %s14, 3
    %p58 = por %p56, %p57
    %p59 = scmp.ne.s32.totalorder %s48, %s49
    %p60 = scmp.eq.s32.totalorder %s14, 0
    %p61 = por %p59, %p60
    %p62 = scmp.ne.s32.totalorder %s48, %s49
    %p63 = scmp.eq.s32.totalorder %s15, 3
    %p64 = por %p62, %p63
    %p66 = scmp.ne.s32.totalorder %s49, %s65
    %p67 = scmp.eq.s32.totalorder %s15, 0
    %p68 = por %p66, %p67
    %s70 = sadd.s32 %s69, 1
    %p73 = scmp.eq.s32.totalorder %s9, 3
    %p74 = scmp.ne.s32.totalorder %s69, %s71
    %p75 = scmp.eq.s32.totalorder %s9, 0
    %p76 = por %p74, %p75
    %p77 = scmp.ne.s32.totalorder %s69, %s71
    %p78 = scmp.eq.s32.totalorder %s14, 3
    %p79 = por %p77, %p78
    %p80 = scmp.ne.s32.totalorder %s71, %s72
    %p81 = scmp.eq.s32.totalorder %s14, 0
    %p82 = por %p80, %p81
    %p83 = scmp.ne.s32.totalorder %s71, %s72
    %p84 = scmp.eq.s32.totalorder %s15, 3
    %p85 = por %p83, %p84
    %p87 = scmp.ne.s32.totalorder %s72, %s86
    %p88 = scmp.eq.s32.totalorder %s15, 0
    %p89 = por %p87, %p88
    %s90 = ssub.s32 %s9, %s16
    %p91 = scmp.eq.s32.totalorder %s90, 0
    %s93 = sadd.s32 %s92, 1
    %s94 = scalar_select %p91, %s92, %s93
    %p97 = pneg %p91
    %p98 = scmp.eq.s32.totalorder %s9, 3
    %p99 = por %p97, %p98
    %p100 = scmp.ne.s32.totalorder %s92, %s95
    %p101 = scmp.eq.s32.totalorder %s9, 0
    %p102 = por %p100, %p101
    %p103 = scmp.ne.s32.totalorder %s92, %s95
    %p104 = scmp.eq.s32.totalorder %s14, 3
    %p105 = por %p103, %p104
    %p106 = scmp.ne.s32.totalorder %s95, %s96
    %p107 = scmp.eq.s32.totalorder %s14, 0
    %p108 = por %p106, %p107
    %p109 = scmp.ne.s32.totalorder %s95, %s96
    %p110 = scmp.eq.s32.totalorder %s15, 3
    %p111 = por %p109, %p110
    %p113 = scmp.ne.s32.totalorder %s96, %s112
    %p114 = scmp.eq.s32.totalorder %s15, 0
    %p115 = por %p113, %p114
    %p116 = scmp.le.s32.totalorder 1, %s9
    %p117 = scmp.lt.s32.totalorder %s9, 5
    %p118 = pnand %p116, %p117
    %p119 = pneg %p118
    // Predicated region
    $region9: #{tpu_custom_call.1} parent=5 // pred_check
      _
    $region10: #{tpu_custom_call.1} parent=5 // pred_check_branch
      %121 = sbr.rel (%p118) target = $region12
    $region11: #{tpu_custom_call.1} parent=5 // pred_region
      %s122 = ssub.s32 %s9, 1
      // Predicated region
      $region13: #{tpu_custom_call.1} parent=11 // pred_check
        %p123 = pneg %p82
      $region14: #{tpu_custom_call.1} parent=11 // pred_check_branch
        %125 = sbr.rel (%p123) target = $region16
      $region15: #{tpu_custom_call.1} parent=11 // pred_region
        _
      $region16: #{tpu_custom_call.1} parent=11 // pred_fallthru
        _
    $region12: #{tpu_custom_call.1} parent=5 // pred_fallthru
      _
    %p126 = scmp.lt.s32.totalorder %s9, 4
    // Predicated region
    $region17: #{tpu_custom_call.1} parent=5 // pred_check
      %p127 = pneg %p126
    $region18: #{tpu_custom_call.1} parent=5 // pred_check_branch
      %129 = sbr.rel (%p127) target = $region20
    $region19: #{tpu_custom_call.1} parent=5 // pred_region
      // Predicated region
      $region21: #{tpu_custom_call.1} parent=19 // pred_check
        %p130 = pneg %p29
      $region22: #{tpu_custom_call.1} parent=19 // pred_check_branch
        %132 = sbr.rel (%p130) target = $region24
      $region23: #{tpu_custom_call.1} parent=19 // pred_region
        %p133 = scmp.lt.s32.totalorder %s9, 3
        %s134 = scalar_select %p133, %s9, 3
        %s135 = smul.addr %s134, 4
        %s136 = smul.addr %s135, 8
        %s137 = scalar_lea.vmem %s0, %s136
      $region24: #{tpu_custom_call.1} parent=19 // pred_fallthru
        _
      // Predicated region
      $region25: #{tpu_custom_call.1} parent=19 // pred_check
        %p138 = pneg %p55
      $region26: #{tpu_custom_call.1} parent=19 // pred_check_branch
        %140 = sbr.rel (%p138) target = $region28
      $region27: #{tpu_custom_call.1} parent=19 // pred_region
        %p141 = scmp.lt.s32.totalorder %s9, 3
        %s142 = scalar_select %p141, %s9, 3
        %s143 = smul.addr %s142, 4
        %s144 = smul.addr %s143, 8
        %s145 = scalar_lea.vmem %s1, %s144
      $region28: #{tpu_custom_call.1} parent=19 // pred_fallthru
        _
    $region20: #{tpu_custom_call.1} parent=5 // pred_fallthru
      _
    %p146 = scmp.le.s32.totalorder 1, %s9
    %p147 = scmp.lt.s32.totalorder %s9, 5
    %p148 = pnand %p146, %p147
    %p149 = pneg %p148
    // Predicated region
    $region29: #{tpu_custom_call.1} parent=5 // pred_check
      _
    $region30: #{tpu_custom_call.1} parent=5 // pred_check_branch
      %151 = sbr.rel (%p148) target = $region32
    $region31: #{tpu_custom_call.1} parent=5 // pred_region
      %s152 = ssub.s32 %s9, 1
      %p153 = scmp.lt.s32.totalorder %s14, 3
      %s154 = scalar_select %p153, %s14, 3
      %s155 = smul.addr %s154, 4
      %s156 = smul.addr %s155, 8
      %s157 = scalar_lea.vmem %s0, %s156
      %p158 = pneg %p35
      %p159 = pneg %p32
      %p160 = scmp.lt.s32.totalorder %s14, 3
      %s161 = scalar_select %p160, %s14, 3
      %s162 = smul.addr %s161, 4
      %s163 = smul.addr %s162, 8
      %s164 = scalar_lea.vmem %s1, %s163
      %p165 = pneg %p61
      %p166 = pneg %p58
      %p167 = pneg %p82
      %p168 = pneg %p79
      %p169 = pneg %p108
      %p170 = pneg %p105
      %p171 = scmp.lt.s32.totalorder %s14, 3
      %s172 = scalar_select %p171, %s14, 3
      %s173 = scalar_lea.vmem %s3, %s172
      %p174 = scmp.lt.s32.totalorder %s14, 3
      %s175 = scalar_select %p174, %s14, 3
      %s176 = smul.addr %s175, 4
      %s177 = smul.addr %s176, 8
      %s178 = scalar_lea.vmem %s0, %s177
      %p179 = scmp.lt.s32.totalorder %s14, 3
      %s180 = scalar_select %p179, %s14, 3
      %s181 = smul.addr %s180, 4
      %s182 = smul.addr %s181, 8
      %s183 = scalar_lea.vmem %s1, %s182
      %p184 = scmp.lt.s32.totalorder %s14, 3
      %s185 = scalar_select %p184, %s14, 3
      %s186 = scalar_lea.vmem %s3, %s185
      %v187 = vld [vmem:[%s178] sm:$0xff]
      %v188 = vld [vmem:[%s178 + $0x8] sm:$0xff]
      %v189 = vld [vmem:[%s178 + $0x10] sm:$0xff]
      %v190 = vld [vmem:[%s178 + $0x18] sm:$0xff]
      %v191 = vld [vmem:[%s183] sm:$0xff]
      %v192 = vld [vmem:[%s183 + $0x8] sm:$0xff]
      %v193 = vld [vmem:[%s183 + $0x10] sm:$0xff]
      %v194 = vld [vmem:[%s183 + $0x18] sm:$0xff]
      %v195 = vld [vmem:[%s2] sm:$0xff]
      %v196 = vld [vmem:[%s2 + $0x8] sm:$0xff]
      %v197 = vld [vmem:[%s2 + $0x10] sm:$0x1]
      %v198 = vld [vmem:[%s2 + $0x18] sm:$0xff]
      %v199 = vld [vmem:[%s2 + $0x20] sm:$0xff]
      %v200 = vld [vmem:[%s2 + $0x28] sm:$0xff]
      %v201 = vld [vmem:[%s2 + $0x30] sm:$0xff]
      %v202 = vld [vmem:[%s2 + $0x38] sm:$0xff]
      %v203 = vld [vmem:[%s2 + $0x40] sm:$0xff]
      %v204 = vld [vmem:[%s2 + $0x48] sm:$0xff]
      %v205 = vld [vmem:[%s2 + $0x50] sm:$0xff]
      %v206 = vld [vmem:[%s2 + $0x58] sm:$0x1]
      %v207 = vld [vmem:[%s2 + $0x60] sm:$0x1]
      %v208 = vld [vmem:[%s2 + $0x61] sm:$0x1]
      %v209 = vld [vmem:[%s2 + $0x62] sm:$0x1]
      %vm210 = vcmask 64512
      %v212 = vsel %vm210, %v191, 0
      %v215 = vsel %vm210, %v192, 0
      %v218 = vsel %vm210, %v193, 0
      %v221 = vsel %vm210, %v194, 0
      %223 = vmatprep.subr.mxu0 0.0
      %224 = vmatpush1.msra.mxu0 %v195
      %225 = vmatprep.subr.mxu0 0.0
      %226 = vmatpush1.msra.mxu0 0.0
      %227 = vmatprep.subr.mxu0 0.0
      %228 = vmatpush1.msra.mxu0 0.0
      %229 = vmatprep.subr.mxu0 0.0
      %230 = vmatpush1.msra.mxu0 0.0
      %231 = vmatprep.subr.mxu0 0.0
      %232 = vmatpush1.msra.mxu0 0.0
      %233 = vmatprep.subr.mxu0 0.0
      %234 = vmatpush1.msra.mxu0 0.0
      %235 = vmatprep.subr.mxu0 0.0
      %236 = vmatpush1.msra.mxu0 0.0
      %237 = vmatprep.subr.mxu0 0.0
      %238 = vmatpush1.msra.mxu0 0.0
      %239 = vmatprep.subr.mxu0 0.0
      %240 = vmatpush1.msra.mxu0 0.0
      %241 = vmatprep.subr.mxu0 0.0
      %242 = vmatpush1.msra.mxu0 0.0
      %243 = vmatprep.subr.mxu0 0.0
      %244 = vmatpush1.msra.mxu0 0.0
      %245 = vmatprep.subr.mxu0 0.0
      %246 = vmatpush1.msra.mxu0 0.0
      %247 = vmatprep.subr.mxu0 0.0
      %248 = vmatpush1.msra.mxu0 0.0
      %249 = vmatprep.subr.mxu0 0.0
      %250 = vmatpush1.msra.mxu0 0.0
      %251 = vmatprep.subr.mxu0 0.0
      %252 = vmatpush1.msra.mxu0 0.0
      %253 = vmatprep.subr.mxu0 0.0
      %254 = vmatpush1.msra.mxu0 0.0
      %255 = vmatprep.subr.mxu0 0.0
      %256 = vmatpush1.msra.mxu0 0.0
      %257 = vmatprep.subr.mxu0 0.0
      %258 = vmatpush1.msra.mxu0 0.0
      %259 = vmatprep.subr.mxu0 0.0
      %260 = vmatpush1.msra.mxu0 0.0
      %261 = vmatprep.subr.mxu0 0.0
      %262 = vmatpush1.msra.mxu0 0.0
      %263 = vmatprep.subr.mxu0 0.0
      %264 = vmatpush1.msra.mxu0 0.0
      %265 = vmatprep.subr.mxu0 0.0
      %266 = vmatpush1.msra.mxu0 0.0
      %267 = vmatprep.subr.mxu0 0.0
      %268 = vmatpush1.msra.mxu0 0.0
      %269 = vmatprep.subr.mxu0 0.0
      %270 = vmatpush1.msra.mxu0 0.0
      %271 = vmatprep.subr.mxu0 0.0
      %272 = vmatpush1.msra.mxu0 0.0
      %273 = vmatprep.subr.mxu0 0.0
      %274 = vmatpush1.msra.mxu0 0.0
      %275 = vmatprep.subr.mxu0 0.0
      %276 = vmatpush1.msra.mxu0 0.0
      %277 = vmatprep.subr.mxu0 0.0
      %278 = vmatpush1.msra.mxu0 0.0
      %279 = vmatprep.subr.mxu0 0.0
      %280 = vmatpush1.msra.mxu0 0.0
      %281 = vmatprep.subr.mxu0 0.0
      %282 = vmatpush1.msra.mxu0 0.0
      %283 = vmatprep.subr.mxu0 0.0
      %284 = vmatpush1.msra.mxu0 0.0
      %285 = vmatprep.subr.mxu0 0.0
      %286 = vmatpush1.msra.mxu0 0.0
      %287 = vmatprep.mubr.f32.mxu0 0.0
      %288 = vmatmul.mubr.f32.gmra.mrb[0].mxu0 %v212
      %v289 = vpop.f32.mrb[0].mxu0
      %v290 = vadd.f32 0.0, %v289
      %v291 = vpop.f32.mrb[0].mxu0
      %292 = vmatprep.mubr.f32.mxu0 0.0
      %293 = vmatmul.mubr.f32.gmra.mrb[0].mxu0 %v215
      %v294 = vpop.f32.mrb[0].mxu0
      %v295 = vadd.f32 0.0, %v294
      %v296 = vpop.f32.mrb[0].mxu0
      %297 = vmatprep.mubr.f32.mxu0 0.0
      %298 = vmatmul.mubr.f32.gmra.mrb[0].mxu0 %v218
      %v299 = vpop.f32.mrb[0].mxu0
      %v300 = vadd.f32 0.0, %v299
      %v301 = vpop.f32.mrb[0].mxu0
      %302 = vmatprep.mubr.f32.mxu0 0.0
      %303 = vmatmul.mubr.f32.gmra.mrb[0].mxu0 %v221
      %v304 = vpop.f32.mrb[0].mxu0
      %v305 = vadd.f32 0.0, %v304
      %v306 = vpop.f32.mrb[0].mxu0
      %307 = vdwg.mxu0
      %v308 = vlaneseq
      %v309 = vshrl.u32 %v308, 7
      %v310 = vsub.s32 0, %v309
      %v311 = vrot.slane %v208, %v310
      %vm312 = vcmask 261120
      %v314 = vsel %vm312, %v187, 0
      %v317 = vsel %vm312, %v188, 0
      %v320 = vsel %vm312, %v189, 0
      %v323 = vsel %vm312, %v190, 0
      %325 = vmatprep.subr.mxu0 0.0
      %326 = vmatpush1.msra.mxu0 %v290
      %327 = vmatprep.subr.mxu0 0.0
      %328 = vmatpush1.msra.mxu0 %v295
      %329 = vmatprep.subr.mxu0 0.0
      %330 = vmatpush1.msra.mxu0 %v300
      %331 = vmatprep.subr.mxu0 0.0
      %332 = vmatpush1.msra.mxu0 %v305
      %333 = vmatprep.subr.mxu0 0.0
      %334 = vmatpush1.msra.mxu0 0.0
      %335 = vmatprep.subr.mxu0 0.0
      %336 = vmatpush1.msra.mxu0 0.0
      %337 = vmatprep.subr.mxu0 0.0
      %338 = vmatpush1.msra.mxu0 0.0
      %339 = vmatprep.subr.mxu0 0.0
      %340 = vmatpush1.msra.mxu0 0.0
      %341 = vmatprep.subr.mxu0 0.0
      %342 = vmatpush1.msra.mxu0 0.0
      %343 = vmatprep.subr.mxu0 0.0
      %344 = vmatpush1.msra.mxu0 0.0
      %345 = vmatprep.subr.mxu0 0.0
      %346 = vmatpush1.msra.mxu0 0.0
      %347 = vmatprep.subr.mxu0 0.0
      %348 = vmatpush1.msra.mxu0 0.0
      %349 = vmatprep.subr.mxu0 0.0
      %350 = vmatpush1.msra.mxu0 0.0
      %351 = vmatprep.subr.mxu0 0.0
      %352 = vmatpush1.msra.mxu0 0.0
      %353 = vmatprep.subr.mxu0 0.0
      %354 = vmatpush1.msra.mxu0 0.0
      %355 = vmatprep.subr.mxu0 0.0
      %356 = vmatpush1.msra.mxu0 0.0
      %357 = vmatprep.subr.mxu0 0.0
      %358 = vmatpush1.msra.mxu0 0.0
      %359 = vmatprep.subr.mxu0 0.0
      %360 = vmatpush1.msra.mxu0 0.0
      %361 = vmatprep.subr.mxu0 0.0
      %362 = vmatpush1.msra.mxu0 0.0
      %363 = vmatprep.subr.mxu0 0.0
      %364 = vmatpush1.msra.mxu0 0.0
      %365 = vmatprep.subr.mxu0 0.0
      %366 = vmatpush1.msra.mxu0 0.0
      %367 = vmatprep.subr.mxu0 0.0
      %368 = vmatpush1.msra.mxu0 0.0
      %369 = vmatprep.subr.mxu0 0.0
      %370 = vmatpush1.msra.mxu0 0.0
      %371 = vmatprep.subr.mxu0 0.0
      %372 = vmatpush1.msra.mxu0 0.0
      %373 = vmatprep.subr.mxu0 0.0
      %374 = vmatpush1.msra.mxu0 0.0
      %375 = vmatprep.subr.mxu0 0.0
      %376 = vmatpush1.msra.mxu0 0.0
      %377 = vmatprep.subr.mxu0 0.0
      %378 = vmatpush1.msra.mxu0 0.0
      %379 = vmatprep.subr.mxu0 0.0
      %380 = vmatpush1.msra.mxu0 0.0
      %381 = vmatprep.subr.mxu0 0.0
      %382 = vmatpush1.msra.mxu0 0.0
      %383 = vmatprep.subr.mxu0 0.0
      %384 = vmatpush1.msra.mxu0 0.0
      %385 = vmatprep.subr.mxu0 0.0
      %386 = vmatpush1.msra.mxu0 0.0
      %387 = vmatprep.subr.mxu0 0.0
      %388 = vmatpush1.msra.mxu0 0.0
      %389 = vmatprep.mubr.f32.mxu0 0.0
      %390 = vmatmul.mubr.f32.gmra.mrb[0].mxu0 %v314
      %v391 = vpop.f32.mrb[0].mxu0
      %v392 = vadd.f32 %v311, %v391
      %v393 = vpop.f32.mrb[0].mxu0
      %394 = vmatprep.mubr.f32.mxu0 0.0
      %395 = vmatmul.mubr.f32.gmra.mrb[0].mxu0 %v317
      %v396 = vpop.f32.mrb[0].mxu0
      %v397 = vadd.f32 %v311, %v396
      %v398 = vpop.f32.mrb[0].mxu0
      %399 = vmatprep.mubr.f32.mxu0 0.0
      %400 = vmatmul.mubr.f32.gmra.mrb[0].mxu0 %v320
      %v401 = vpop.f32.mrb[0].mxu0
      %v402 = vadd.f32 %v311, %v401
      %v403 = vpop.f32.mrb[0].mxu0
      %404 = vmatprep.mubr.f32.mxu0 0.0
      %405 = vmatmul.mubr.f32.gmra.mrb[0].mxu0 %v323
      %v406 = vpop.f32.mrb[0].mxu0
      %v407 = vadd.f32 %v311, %v406
      %v408 = vpop.f32.mrb[0].mxu0
      %409 = vdwg.mxu0
      %v410 = vmax.f32 %v392, 0.0
      %v411 = vmax.f32 %v397, 0.0
      %v412 = vmax.f32 %v402, 0.0
      %v413 = vmax.f32 %v407, 0.0
      %v414 = vadd.f32 %v410, %v191
      %v415 = vadd.f32 %v411, %v192
      %v416 = vadd.f32 %v412, %v193
      %v417 = vadd.f32 %v413, %v194
      %v418 = vsel %vm210, %v414, 0.0
      %v419 = vsel %vm210, %v415, 0.0
      %v420 = vadd.f32 %v418, %v419
      %v421 = vrot.slane %v420, 4
      %v422 = vadd.f32 %v420, %v421
      %v423 = vrot.slane %v422, 2
      %v424 = vadd.f32 %v422, %v423
      %v425 = vrot.slane %v424, 1
      %v426 = vadd.f32 %v424, %v425
      %v427 = vsel %vm210, %v416, 0.0
      %v428 = vsel %vm210, %v417, 0.0
      %v429 = vadd.f32 %v427, %v428
      %v430 = vrot.slane %v429, 4
      %v431 = vadd.f32 %v429, %v430
      %v432 = vrot.slane %v431, 2
      %v433 = vadd.f32 %v431, %v432
      %v434 = vrot.slane %v433, 1
      %v435 = vadd.f32 %v433, %v434
      %vm436 = vcmask 1040384
      %v437 = vsel %vm436, %v426, %v435
      %v438 = vlaneseq
      %v439 = vshrl.u32 %v438, 7
      %v440 = vsub.s32 0, %v439
      %v441 = vrot.slane %v197, %v440
      %v443 = vsel %vm210, %v437, 0
      %445 = vmatprep.subr.mxu0 0.0
      %446 = vmatpush1.msra.mxu0 %v196
      %447 = vmatprep.subr.mxu0 0.0
      %448 = vmatpush1.msra.mxu0 0.0
      %449 = vmatprep.subr.mxu0 0.0
      %450 = vmatpush1.msra.mxu0 0.0
      %451 = vmatprep.subr.mxu0 0.0
      %452 = vmatpush1.msra.mxu0 0.0
      %453 = vmatprep.subr.mxu0 0.0
      %454 = vmatpush1.msra.mxu0 0.0
      %455 = vmatprep.subr.mxu0 0.0
      %456 = vmatpush1.msra.mxu0 0.0
      %457 = vmatprep.subr.mxu0 0.0
      %458 = vmatpush1.msra.mxu0 0.0
      %459 = vmatprep.subr.mxu0 0.0
      %460 = vmatpush1.msra.mxu0 0.0
      %461 = vmatprep.subr.mxu0 0.0
      %462 = vmatpush1.msra.mxu0 0.0
      %463 = vmatprep.subr.mxu0 0.0
      %464 = vmatpush1.msra.mxu0 0.0
      %465 = vmatprep.subr.mxu0 0.0
      %466 = vmatpush1.msra.mxu0 0.0
      %467 = vmatprep.subr.mxu0 0.0
      %468 = vmatpush1.msra.mxu0 0.0
      %469 = vmatprep.subr.mxu0 0.0
      %470 = vmatpush1.msra.mxu0 0.0
      %471 = vmatprep.subr.mxu0 0.0
      %472 = vmatpush1.msra.mxu0 0.0
      %473 = vmatprep.subr.mxu0 0.0
      %474 = vmatpush1.msra.mxu0 0.0
      %475 = vmatprep.subr.mxu0 0.0
      %476 = vmatpush1.msra.mxu0 0.0
      %477 = vmatprep.subr.mxu0 0.0
      %478 = vmatpush1.msra.mxu0 0.0
      %479 = vmatprep.subr.mxu0 0.0
      %480 = vmatpush1.msra.mxu0 0.0
      %481 = vmatprep.subr.mxu0 0.0
      %482 = vmatpush1.msra.mxu0 0.0
      %483 = vmatprep.subr.mxu0 0.0
      %484 = vmatpush1.msra.mxu0 0.0
      %485 = vmatprep.subr.mxu0 0.0
      %486 = vmatpush1.msra.mxu0 0.0
      %487 = vmatprep.subr.mxu0 0.0
      %488 = vmatpush1.msra.mxu0 0.0
      %489 = vmatprep.subr.mxu0 0.0
      %490 = vmatpush1.msra.mxu0 0.0
      %491 = vmatprep.subr.mxu0 0.0
      %492 = vmatpush1.msra.mxu0 0.0
      %493 = vmatprep.subr.mxu0 0.0
      %494 = vmatpush1.msra.mxu0 0.0
      %495 = vmatprep.subr.mxu0 0.0
      %496 = vmatpush1.msra.mxu0 0.0
      %497 = vmatprep.subr.mxu0 0.0
      %498 = vmatpush1.msra.mxu0 0.0
      %499 = vmatprep.subr.mxu0 0.0
      %500 = vmatpush1.msra.mxu0 0.0
      %501 = vmatprep.subr.mxu0 0.0
      %502 = vmatpush1.msra.mxu0 0.0
      %503 = vmatprep.subr.mxu0 0.0
      %504 = vmatpush1.msra.mxu0 0.0
      %505 = vmatprep.subr.mxu0 0.0
      %506 = vmatpush1.msra.mxu0 0.0
      %507 = vmatprep.subr.mxu0 0.0
      %508 = vmatpush1.msra.mxu0 0.0
      %509 = vmatprep.mubr.f32.mxu0 0.0
      %510 = vmatmul.mubr.f32.gmra.mrb[0].mxu0 %v443
      %v511 = vpop.f32.mrb[0].mxu0
      %v512 = vadd.f32 %v441, %v511
      %v513 = vpop.f32.mrb[0].mxu0
      %514 = vdwg.mxu0
      %v515 = vmax.f32 %v512, 0.0
      %v516 = vlaneseq
      %v517 = vshrl.u32 %v516, 7
      %v518 = vsub.s32 0, %v517
      %v519 = vrot.slane %v206, %v518
      %vm520 = vcmask 523264
      %v522 = vsel %vm520, %v515, 0
      %524 = vmatprep.subr.mxu0 0.0
      %525 = vmatpush1.msra.mxu0 %v198
      %526 = vmatprep.subr.mxu0 0.0
      %527 = vmatpush1.msra.mxu0 %v199
      %528 = vmatprep.subr.mxu0 0.0
      %529 = vmatpush1.msra.mxu0 %v200
      %530 = vmatprep.subr.mxu0 0.0
      %531 = vmatpush1.msra.mxu0 %v201
      %532 = vmatprep.subr.mxu0 0.0
      %533 = vmatpush1.msra.mxu0 %v202
      %534 = vmatprep.subr.mxu0 0.0
      %535 = vmatpush1.msra.mxu0 %v203
      %536 = vmatprep.subr.mxu0 0.0
      %537 = vmatpush1.msra.mxu0 %v204
      %538 = vmatprep.subr.mxu0 0.0
      %539 = vmatpush1.msra.mxu0 %v205
      %540 = vmatprep.subr.mxu0 0.0
      %541 = vmatpush1.msra.mxu0 0.0
      %542 = vmatprep.subr.mxu0 0.0
      %543 = vmatpush1.msra.mxu0 0.0
      %544 = vmatprep.subr.mxu0 0.0
      %545 = vmatpush1.msra.mxu0 0.0
      %546 = vmatprep.subr.mxu0 0.0
      %547 = vmatpush1.msra.mxu0 0.0
      %548 = vmatprep.subr.mxu0 0.0
      %549 = vmatpush1.msra.mxu0 0.0
      %550 = vmatprep.subr.mxu0 0.0
      %551 = vmatpush1.msra.mxu0 0.0
      %552 = vmatprep.subr.mxu0 0.0
      %553 = vmatpush1.msra.mxu0 0.0
      %554 = vmatprep.subr.mxu0 0.0
      %555 = vmatpush1.msra.mxu0 0.0
      %556 = vmatprep.subr.mxu0 0.0
      %557 = vmatpush1.msra.mxu0 0.0
      %558 = vmatprep.subr.mxu0 0.0
      %559 = vmatpush1.msra.mxu0 0.0
      %560 = vmatprep.subr.mxu0 0.0
      %561 = vmatpush1.msra.mxu0 0.0
      %562 = vmatprep.subr.mxu0 0.0
      %563 = vmatpush1.msra.mxu0 0.0
      %564 = vmatprep.subr.mxu0 0.0
      %565 = vmatpush1.msra.mxu0 0.0
      %566 = vmatprep.subr.mxu0 0.0
      %567 = vmatpush1.msra.mxu0 0.0
      %568 = vmatprep.subr.mxu0 0.0
      %569 = vmatpush1.msra.mxu0 0.0
      %570 = vmatprep.subr.mxu0 0.0
      %571 = vmatpush1.msra.mxu0 0.0
      %572 = vmatprep.subr.mxu0 0.0
      %573 = vmatpush1.msra.mxu0 0.0
      %574 = vmatprep.subr.mxu0 0.0
      %575 = vmatpush1.msra.mxu0 0.0
      %576 = vmatprep.subr.mxu0 0.0
      %577 = vmatpush1.msra.mxu0 0.0
      %578 = vmatprep.subr.mxu0 0.0
      %579 = vmatpush1.msra.mxu0 0.0
      %580 = vmatprep.subr.mxu0 0.0
      %581 = vmatpush1.msra.mxu0 0.0
      %582 = vmatprep.subr.mxu0 0.0
      %583 = vmatpush1.msra.mxu0 0.0
      %584 = vmatprep.subr.mxu0 0.0
      %585 = vmatpush1.msra.mxu0 0.0
      %586 = vmatprep.subr.mxu0 0.0
      %587 = vmatpush1.msra.mxu0 0.0
      %588 = vmatprep.mubr.f32.mxu0 0.0
      %589 = vmatmul.mubr.f32.gmra.mrb[0].mxu0 %v522
      %v590 = vpop.f32.mrb[0].mxu0
      %v591 = vadd.f32 %v519, %v590
      %v592 = vpop.f32.mrb[0].mxu0
      %593 = vdwg.mxu0
      %v594 = vmax.f32 %v591, 0.0
      %v595 = vlaneseq
      %v596 = vshrl.u32 %v595, 7
      %v597 = vsub.s32 0, %v596
      %v598 = vrot.slane %v207, %v597
      %v599 = vmul.f32 %v594, %v598
      %vm600 = vcmask 517120
      %v601 = vsel %vm600, %v599, 0.0
      %602 = vadd.xlane.f32.xlu0 %v601
      %v603 = vpop.xlane.xlu0 %602
      %v604 = vlaneseq
      %v605 = vshrl.u32 %v604, 7
      %v606 = vsub.s32 0, %v605
      %v607 = vrot.slane %v209, %v606
      %v608 = vadd.f32 %v603, %v607
      %610 = vset.pattern.permute.xlu0 0
      %611 = vperm.xlu0 %610, %v608
      %v612 = vpop.permute.xlu0 %611
      %v613 = vlaneseq
      %v614 = vand.u32 %v613, 127
      %v615 = vlaneseq
      %v616 = vshrl.u32 %v615, 7
      %v617 = vsub.s32 %v614, %v616
      %v618 = vrot.slane %v612, %v617
      %vm620 = vcmask 8192
      %621 = vst.msk [vmem:[%s186] sm:$0x1] %vm620, %v618
      %p622 = scmp.lt.s32.totalorder %s14, 3
      %s623 = scalar_select %p622, %s14, 3
      %s624 = scalar_lea.vmem %s3, %s623
      // Predicated region
      $region33: #{tpu_custom_call.1} parent=31 // pred_check
        %p625 = pneg %p105
      $region34: #{tpu_custom_call.1} parent=31 // pred_check_branch
        %627 = sbr.rel (%p625) target = $region36
      $region35: #{tpu_custom_call.1} parent=31 // pred_region
        _
      $region36: #{tpu_custom_call.1} parent=31 // pred_fallthru
        _
    $region32: #{tpu_custom_call.1} parent=5 // pred_fallthru
      _
    %p628 = scmp.le.s32.totalorder 2, %s9
    // Predicated region
    $region37: #{tpu_custom_call.1} parent=5 // pred_check
      %p629 = pneg %p628
    $region38: #{tpu_custom_call.1} parent=5 // pred_check_branch
      %631 = sbr.rel (%p629) target = $region40
    $region39: #{tpu_custom_call.1} parent=5 // pred_region
      %s632 = ssub.s32 %s9, 2
      // Predicated region
      $region41: #{tpu_custom_call.1} parent=39 // pred_check
        %p633 = pneg %p111
      $region42: #{tpu_custom_call.1} parent=39 // pred_check_branch
        %635 = sbr.rel (%p633) target = $region44
      $region43: #{tpu_custom_call.1} parent=39 // pred_region
        %p636 = scmp.lt.s32.totalorder %s15, 3
        %s637 = scalar_select %p636, %s15, 3
        %s638 = scalar_lea.vmem %s3, %s637
      $region44: #{tpu_custom_call.1} parent=39 // pred_fallthru
        _
    $region40: #{tpu_custom_call.1} parent=5 // pred_fallthru
      _
  $region6: #{tpu_custom_call.1} parent=0 // loop_footer
    %s13 = sadd.s32 1, %s9
  $region7: #{tpu_custom_call.1} parent=0 // loop_footer_branch
    %8 = sbr.rel target = $region3
  $region8: #{tpu_custom_call.1} parent=0 // loop_exit
    _

</llo_original>
